<compile_context>
chip_gen: v5e
topology: v5e:2x2
jax: 0.10.0
libtpu: 0.0.40
codegen_flags: <defaults>
</compile_context>

<pallas_src>
import jax
import jax.numpy as jnp
from jax.experimental import pallas as pl
from jax.experimental.pallas import tpu as pltpu

OBS = 24          # observation feature size
HID = 64          # base.output_size / recurrent_hidden_state_size
ACT = 5           # action_space.n (Discrete)
B = 16            # batch (env/agent rows) -- processed in ONE grid step
SLAB = 128        # lane width of packed input / packed output slabs
BIAS_W = 384      # lane width of packed bias slab: [benc | b_gru | b_head | pad]


def _policy_act_kernel(xhm_ref, wenc_ref, wgru_ref, whead_ref, b_ref, out_ref):
    """Fused SocialPolicy.act(deterministic=True) forward, whole batch at once."""
    xhm = xhm_ref[...]                                   # (B, 128) f32
    h = xhm[:, 0:HID]                                    # (B, HID)  lane-0 aligned
    m = xhm[:, HID + OBS:HID + OBS + 1]                  # (B, 1)
    h0 = h * m                                           # recurrent state gating

    benc = b_ref[:, 0:HID]                               # (1, HID)
    bgru = b_ref[:, HID:5 * HID]                         # (1, 4*HID)
    bhead = b_ref[:, 5 * HID:5 * HID + ACT + 1]          # (1, ACT+1)

    # --- encoder: whole lane-aligned slab as LHS (non-obs rows of wenc are 0) ---
    feat = jnp.tanh(
        jnp.dot(xhm.astype(jnp.bfloat16), wenc_ref[...],
                preferred_element_type=jnp.float32) + benc)            # (B, HID)

    # --- GRU cell via ONE fused K=128 matmul ---
    # wgru rows: [wih(feat) ; whh(h0)]; columns: [ r | z | i_n | h_n ] with zero
    # blocks so cols r/z give (i_r+h_r, i_z+h_z), cols i_n/h_n stay separate.
    xh = jnp.concatenate([feat, h0], axis=-1).astype(jnp.bfloat16)     # (B, 2*HID)
    g = jnp.dot(xh, wgru_ref[...],
                preferred_element_type=jnp.float32) + bgru             # (B, 4*HID)
    rz = jax.nn.sigmoid(g[:, 0:2 * HID])
    r = rz[:, 0:HID]
    z = rz[:, HID:2 * HID]
    i_n = g[:, 2 * HID:3 * HID]
    h_n = g[:, 3 * HID:4 * HID]
    n = jnp.tanh(i_n + r * h_n)
    h_new = (1.0 - z) * n + z * h0                                     # (B, HID)

    # --- fused critic + Categorical heads: columns [ logits | value ] ---
    head = jnp.dot(h_new.astype(jnp.bfloat16), whead_ref[...],
                   preferred_element_type=jnp.float32) + bhead         # (B, ACT+1)
    logits = head[:, 0:ACT]
    value = head[:, ACT:ACT + 1]
    mx = jnp.max(logits, axis=-1, keepdims=True)
    lse = mx + jnp.log(jnp.sum(jnp.exp(logits - mx), axis=-1, keepdims=True))
    lane = jax.lax.broadcasted_iota(jnp.int32, logits.shape, 1)
    # dist.mode() == argmax(logits); first index on ties (torch.argmax semantics)
    action = jnp.min(jnp.where(logits == mx, lane, ACT), axis=-1, keepdims=True)
    alp = mx - lse                                                     # log_prob(mode)

    # --- single lane-dense packed output: [ h_new | value | action | alp | 0.. ] ---
    out_ref[:, 0:HID] = h_new
    out_ref[:, HID:HID + 1] = value
    out_ref[:, HID + 1:HID + 2] = action.astype(jnp.float32)
    out_ref[:, HID + 2:HID + 3] = alp
    out_ref[:, HID + 3:SLAB] = jnp.zeros((xhm.shape[0], SLAB - HID - 3), jnp.float32)


def pack_params(raw_params):
    """Consolidate the 10 raw parameter tensors into 4 slabs (3x bf16 + 1x f32)."""
    (wenc, benc, wih, bih, whh, bhh, wcrit, bcrit, wdist, bdist) = raw_params
    H = HID
    # Encoder weights padded to K=SLAB, rows aligned with the [h|obs|mask] slab:
    # only the obs rows (HID:HID+OBS) carry weights; h / mask / pad rows are 0.
    wenc_pad = jnp.zeros((SLAB, H), jnp.float32).at[H:H + OBS, :].set(wenc)
    zero = jnp.zeros((H, H), jnp.float32)
    # (2H, 4H): rows [wih ; whh], columns [ r | z | i_n | h_n ]
    wgru = jnp.concatenate([
        jnp.concatenate([wih[:, :2 * H], wih[:, 2 * H:], zero], axis=1),
        jnp.concatenate([whh[:, :2 * H], zero, whh[:, 2 * H:]], axis=1),
    ], axis=0)
    whead = jnp.concatenate([wdist, wcrit], axis=1)                    # (H, ACT+1)
    bgru = jnp.concatenate([bih[:, :2 * H] + bhh[:, :2 * H],
                            bih[:, 2 * H:], bhh[:, 2 * H:]], axis=1)   # (1, 4H)
    bhead = jnp.concatenate([bdist, bcrit], axis=1)                    # (1, ACT+1)
    biases = jnp.concatenate([benc, bgru, bhead], axis=1)              # (1, 5H+ACT+1)
    biases = jnp.pad(biases, ((0, 0), (0, BIAS_W - biases.shape[1])))
    return (wenc_pad.astype(jnp.bfloat16), wgru.astype(jnp.bfloat16),
            whead.astype(jnp.bfloat16), biases.astype(jnp.float32))


def social_policy_act(obs, rnn_hxs, masks, packed_params):
    """Pallas-fused SocialPolicy.act(deterministic=True)."""
    wenc, wgru, whead, biases = packed_params
    bsz = obs.shape[0]
    pad = jnp.zeros((bsz, SLAB - (HID + OBS + 1)), jnp.float32)
    # slab lanes: [ h(0:64) | obs(64:88) | mask(88) | pad ] — h is lane-0 aligned
    xhm = jnp.concatenate(
        [rnn_hxs.astype(jnp.float32), obs.astype(jnp.float32),
         masks.astype(jnp.float32), pad], axis=-1)                     # (B, 128)

    full = lambda shp: pl.BlockSpec(shp, lambda i: (0, 0))

    out = pl.pallas_call(
        _policy_act_kernel,
        out_shape=jax.ShapeDtypeStruct((bsz, SLAB), jnp.float32),
        grid_spec=pltpu.PrefetchScalarGridSpec(
            num_scalar_prefetch=0,
            grid=(1,),                                   # whole batch in one step
            in_specs=[full(xhm.shape), full(wenc.shape), full(wgru.shape),
                      full(whead.shape), full(biases.shape)],
            out_specs=full((bsz, SLAB)),
        ),
        input_output_aliases={0: 0},                     # reuse the xhm slab buffer
        compiler_params=pltpu.CompilerParams(
            dimension_semantics=("arbitrary",)),
    )(xhm, wenc, wgru, whead, biases)

    value = out[:, HID]                                  # matches value.squeeze(-1)
    action = out[:, HID + 1:HID + 2].astype(jnp.int32)
    alp = out[:, HID + 2:HID + 3]
    h_new = out[:, 0:HID]
    return value, action, alp, h_new


def _init_params(key):
    ks = jax.random.split(key, 10)
    s = lambda k, shp, scale: (scale * jax.random.normal(k, shp)).astype(jnp.float32)
    wenc = s(ks[0], (OBS, HID), 0.1)
    benc = jnp.zeros((1, HID), jnp.float32)
    wih = s(ks[1], (HID, 3 * HID), 0.1)
    bih = s(ks[2], (1, 3 * HID), 0.01)
    whh = s(ks[3], (HID, 3 * HID), 0.1)
    bhh = s(ks[4], (1, 3 * HID), 0.01)
    wcrit = s(ks[5], (HID, 1), 0.1)
    bcrit = jnp.zeros((1, 1), jnp.float32)
    wdist = s(ks[6], (HID, ACT), 0.1)
    bdist = jnp.zeros((1, ACT), jnp.float32)
    return (wenc, benc, wih, bih, whh, bhh, wcrit, bcrit, wdist, bdist)


def _reference_act(obs, rnn_hxs, masks, raw_params):
    """Pure-JAX reference with the same bf16-operand / f32-accumulate matmuls."""
    (wenc, benc, wih, bih, whh, bhh, wcrit, bcrit, wdist, bdist) = raw_params
    bf, f32 = jnp.bfloat16, jnp.float32
    dot = lambda a, b: jnp.dot(a.astype(bf), b.astype(bf), preferred_element_type=f32)
    feat = jnp.tanh(dot(obs, wenc) + benc)
    h0 = rnn_hxs * masks
    gi = dot(feat, wih) + bih
    gh = dot(h0, whh) + bhh
    i_r, i_z, i_n = jnp.split(gi, 3, axis=-1)
    h_r, h_z, h_n = jnp.split(gh, 3, axis=-1)
    r = jax.nn.sigmoid(i_r + h_r)
    z = jax.nn.sigmoid(i_z + h_z)
    n = jnp.tanh(i_n + r * h_n)
    h_new = (1.0 - z) * n + z * h0
    value = dot(h_new, wcrit) + bcrit
    logits = dot(h_new, wdist) + bdist
    logp = jax.nn.log_softmax(logits, axis=-1)
    action = jnp.argmax(logits, axis=-1, keepdims=True)
    alp = jnp.take_along_axis(logp, action, axis=-1)
    return value.squeeze(-1), action.astype(jnp.int32), alp, h_new


if __name__ == "__main__":
    key = jax.random.PRNGKey(0)
    kp, kx, kh, km = jax.random.split(key, 4)

    raw_params = _init_params(kp)
    packed_params = pack_params(raw_params)

    obs = jax.random.normal(kx, (B, OBS), jnp.float32)
    rnn_hxs = jax.random.normal(kh, (B, HID), jnp.float32)
    masks = (jax.random.uniform(km, (B, 1)) > 0.3).astype(jnp.float32)

    act_fn = jax.jit(social_policy_act)
    value, action, alp, hxs = jax.block_until_ready(
        act_fn(obs, rnn_hxs, masks, packed_params))

    v_r, a_r, alp_r, h_r = _reference_act(obs, rnn_hxs, masks, raw_params)
    assert value.shape == (B,) and action.shape == (B, 1)
    assert alp.shape == (B, 1) and hxs.shape == (B, HID)
    assert jnp.allclose(value, v_r, atol=2e-3, rtol=2e-3)
    assert jnp.array_equal(action, a_r)
    assert jnp.allclose(alp, alp_r, atol=2e-3, rtol=2e-3)
    assert jnp.allclose(hxs, h_r, atol=2e-3, rtol=2e-3)

    print("KERNEL_OK")
</pallas_src>

<mosaic_0001>
module attributes {stable_mosaic.version = 11 : i64} {
  func.func @_policy_act_kernel(%arg0: i32, %arg1: memref<16x128xf32, #tpu.memory_space<vmem>>, %arg2: memref<128x64xbf16, #tpu.memory_space<vmem>>, %arg3: memref<128x256xbf16, #tpu.memory_space<vmem>>, %arg4: memref<64x6xbf16, #tpu.memory_space<vmem>>, %arg5: memref<1x384xf32, #tpu.memory_space<vmem>>, %arg6: memref<16x128xf32, #tpu.memory_space<vmem>>) attributes {dimension_semantics = [#tpu.dimension_semantics<arbitrary>], iteration_bounds = array<i64: 1>, scalar_prefetch = 0 : i64, scratch_operands = 0 : i64, tpu.core_type = #tpu.core_type<tc>, window_params = [{pipeline_mode = #tpu.pipeline_mode<synchronous>, transform_indices = @transform_0, window_bounds = array<i64: 16, 128>}, {pipeline_mode = #tpu.pipeline_mode<synchronous>, transform_indices = @transform_1, window_bounds = array<i64: 128, 64>}, {pipeline_mode = #tpu.pipeline_mode<synchronous>, transform_indices = @transform_2, window_bounds = array<i64: 128, 256>}, {pipeline_mode = #tpu.pipeline_mode<synchronous>, transform_indices = @transform_3, window_bounds = array<i64: 64, 6>}, {pipeline_mode = #tpu.pipeline_mode<synchronous>, transform_indices = @transform_4, window_bounds = array<i64: 1, 384>}, {pipeline_mode = #tpu.pipeline_mode<synchronous>, transform_indices = @transform_5, window_bounds = array<i64: 16, 128>}]} {
    %c0 = arith.constant 0 : index
    %c0_0 = arith.constant 0 : index
    %0 = vector.load %arg1[%c0, %c0_0] : memref<16x128xf32, #tpu.memory_space<vmem>>, vector<16x128xf32>
    %1 = vector.extract_strided_slice %0 {offsets = [0, 0], sizes = [16, 64], strides = [1, 1]} : vector<16x128xf32> to vector<16x64xf32>
    %2 = vector.extract_strided_slice %0 {offsets = [0, 88], sizes = [16, 1], strides = [1, 1]} : vector<16x128xf32> to vector<16x1xf32>
    %3 = vector.broadcast %2 : vector<16x1xf32> to vector<16x64xf32>
    %4 = arith.mulf %1, %3 : vector<16x64xf32>
    %c0_1 = arith.constant 0 : index
    %c0_2 = arith.constant 0 : index
    %5 = vector.load %arg5[%c0_1, %c0_2] : memref<1x384xf32, #tpu.memory_space<vmem>>, vector<1x64xf32>
    %c0_3 = arith.constant 0 : index
    %c64 = arith.constant 64 : index
    %6 = vector.load %arg5[%c0_3, %c64] : memref<1x384xf32, #tpu.memory_space<vmem>>, vector<1x256xf32>
    %c0_4 = arith.constant 0 : index
    %c320 = arith.constant 320 : index
    %7 = vector.load %arg5[%c0_4, %c320] : memref<1x384xf32, #tpu.memory_space<vmem>>, vector<1x6xf32>
    %8 = arith.truncf %0 : vector<16x128xf32> to vector<16x128xbf16>
    %c0_5 = arith.constant 0 : index
    %c0_6 = arith.constant 0 : index
    %9 = vector.load %arg2[%c0_5, %c0_6] : memref<128x64xbf16, #tpu.memory_space<vmem>>, vector<128x64xbf16>
    %cst = arith.constant dense<0.000000e+00> : vector<16x64xf32>
    %10 = tpu.matmul %8, %9, %cst {dimension_numbers = #tpu.dot_dimension_numbers<[1], [0], [0], [1], [0, 0, 1, 1], [], []>} : vector<16x128xbf16>, vector<128x64xbf16>, vector<16x64xf32> -> vector<16x64xf32>
    %11 = vector.broadcast %5 : vector<1x64xf32> to vector<16x64xf32>
    %12 = arith.addf %10, %11 : vector<16x64xf32>
    %13 = math.tanh %12 : vector<16x64xf32>
    %14 = tpu.concatenate %13, %4 in 1 : vector<16x64xf32>, vector<16x64xf32> -> vector<16x128xf32>
    %15 = arith.truncf %14 : vector<16x128xf32> to vector<16x128xbf16>
    %c0_7 = arith.constant 0 : index
    %c0_8 = arith.constant 0 : index
    %16 = vector.load %arg3[%c0_7, %c0_8] : memref<128x256xbf16, #tpu.memory_space<vmem>>, vector<128x256xbf16>
    %cst_9 = arith.constant dense<0.000000e+00> : vector<16x256xf32>
    %17 = tpu.matmul %15, %16, %cst_9 {dimension_numbers = #tpu.dot_dimension_numbers<[1], [0], [0], [1], [0, 0, 1, 1], [], []>} : vector<16x128xbf16>, vector<128x256xbf16>, vector<16x256xf32> -> vector<16x256xf32>
    %18 = vector.broadcast %6 : vector<1x256xf32> to vector<16x256xf32>
    %19 = arith.addf %17, %18 : vector<16x256xf32>
    %20 = vector.extract_strided_slice %19 {offsets = [0, 0], sizes = [16, 128], strides = [1, 1]} : vector<16x256xf32> to vector<16x128xf32>
    %21 = arith.negf %20 : vector<16x128xf32>
    %22 = math.exp %21 : vector<16x128xf32>
    %cst_10 = arith.constant 1.000000e+00 : f32
    %23 = vector.broadcast %cst_10 : f32 to vector<16x128xf32>
    %24 = arith.addf %23, %22 : vector<16x128xf32>
    %25 = arith.divf %23, %24 : vector<16x128xf32>
    %26 = vector.extract_strided_slice %25 {offsets = [0, 0], sizes = [16, 64], strides = [1, 1]} : vector<16x128xf32> to vector<16x64xf32>
    %27 = vector.extract_strided_slice %25 {offsets = [0, 64], sizes = [16, 64], strides = [1, 1]} : vector<16x128xf32> to vector<16x64xf32>
    %28 = vector.extract_strided_slice %19 {offsets = [0, 128], sizes = [16, 64], strides = [1, 1]} : vector<16x256xf32> to vector<16x64xf32>
    %29 = vector.extract_strided_slice %19 {offsets = [0, 192], sizes = [16, 64], strides = [1, 1]} : vector<16x256xf32> to vector<16x64xf32>
    %30 = arith.mulf %26, %29 : vector<16x64xf32>
    %31 = arith.addf %28, %30 : vector<16x64xf32>
    %32 = math.tanh %31 : vector<16x64xf32>
    %cst_11 = arith.constant 1.000000e+00 : f32
    %33 = vector.broadcast %cst_11 : f32 to vector<16x64xf32>
    %34 = arith.subf %33, %27 : vector<16x64xf32>
    %35 = arith.mulf %34, %32 : vector<16x64xf32>
    %36 = arith.mulf %27, %4 : vector<16x64xf32>
    %37 = arith.addf %35, %36 : vector<16x64xf32>
    %38 = arith.truncf %37 : vector<16x64xf32> to vector<16x64xbf16>
    %c0_12 = arith.constant 0 : index
    %c0_13 = arith.constant 0 : index
    %39 = vector.load %arg4[%c0_12, %c0_13] : memref<64x6xbf16, #tpu.memory_space<vmem>>, vector<64x6xbf16>
    %cst_14 = arith.constant dense<0.000000e+00> : vector<16x6xf32>
    %40 = tpu.matmul %38, %39, %cst_14 {dimension_numbers = #tpu.dot_dimension_numbers<[1], [0], [0], [1], [0, 0, 1, 1], [], []>} : vector<16x64xbf16>, vector<64x6xbf16>, vector<16x6xf32> -> vector<16x6xf32>
    %41 = vector.broadcast %7 : vector<1x6xf32> to vector<16x6xf32>
    %42 = arith.addf %40, %41 : vector<16x6xf32>
    %43 = vector.extract_strided_slice %42 {offsets = [0, 0], sizes = [16, 5], strides = [1, 1]} : vector<16x6xf32> to vector<16x5xf32>
    %44 = vector.extract_strided_slice %42 {offsets = [0, 5], sizes = [16, 1], strides = [1, 1]} : vector<16x6xf32> to vector<16x1xf32>
    %cst_15 = arith.constant dense<0xFF800000> : vector<16xf32>
    %45 = vector.multi_reduction <maximumf>, %43, %cst_15 [1] : vector<16x5xf32> to vector<16xf32>
    %46 = vector.shape_cast %45 : vector<16xf32> to vector<16x1xf32>
    %47 = vector.broadcast %46 : vector<16x1xf32> to vector<16x5xf32>
    %48 = arith.subf %43, %47 : vector<16x5xf32>
    %49 = math.exp %48 : vector<16x5xf32>
    %cst_16 = arith.constant dense<0.000000e+00> : vector<16xf32>
    %50 = vector.multi_reduction <add>, %49, %cst_16 [1] : vector<16x5xf32> to vector<16xf32>
    %51 = vector.shape_cast %50 : vector<16xf32> to vector<16x1xf32>
    %52 = math.log %51 : vector<16x1xf32>
    %53 = arith.addf %46, %52 : vector<16x1xf32>
    %54 = tpu.iota {dimensions = array<i32: 1>} : vector<16x5xi32>
    %55 = vector.broadcast %46 : vector<16x1xf32> to vector<16x5xf32>
    %56 = arith.cmpf oeq, %43, %55 : vector<16x5xf32>
    %c5_i32 = arith.constant 5 : i32
    %57 = vector.broadcast %c5_i32 : i32 to vector<16x5xi32>
    %58 = arith.select %56, %54, %57 : vector<16x5xi1>, vector<16x5xi32>
    %cst_17 = arith.constant dense<2147483647> : vector<16xi32>
    %59 = vector.multi_reduction <minsi>, %58, %cst_17 [1] : vector<16x5xi32> to vector<16xi32>
    %60 = vector.shape_cast %59 : vector<16xi32> to vector<16x1xi32>
    %61 = arith.subf %46, %53 : vector<16x1xf32>
    %c0_18 = arith.constant 0 : index
    %c0_19 = arith.constant 0 : index
    %62 = vector.load %arg6[%c0_18, %c0_19] : memref<16x128xf32, #tpu.memory_space<vmem>>, vector<16x64xf32>
    tpu.vector_store %arg6[%c0_18, %c0_19], %37 {strides = array<i32>} : memref<16x128xf32, #tpu.memory_space<vmem>>, vector<16x64xf32>,
    %c0_20 = arith.constant 0 : index
    %c64_21 = arith.constant 64 : index
    %63 = vector.load %arg6[%c0_20, %c64_21] : memref<16x128xf32, #tpu.memory_space<vmem>>, vector<16x1xf32>
    tpu.vector_store %arg6[%c0_20, %c64_21], %44 {strides = array<i32>} : memref<16x128xf32, #tpu.memory_space<vmem>>, vector<16x1xf32>,
    %64 = arith.sitofp %60 : vector<16x1xi32> to vector<16x1xf32>
    %c0_22 = arith.constant 0 : index
    %c65 = arith.constant 65 : index
    %65 = vector.load %arg6[%c0_22, %c65] : memref<16x128xf32, #tpu.memory_space<vmem>>, vector<16x1xf32>
    tpu.vector_store %arg6[%c0_22, %c65], %64 {strides = array<i32>} : memref<16x128xf32, #tpu.memory_space<vmem>>, vector<16x1xf32>,
    %c0_23 = arith.constant 0 : index
    %c66 = arith.constant 66 : index
    %66 = vector.load %arg6[%c0_23, %c66] : memref<16x128xf32, #tpu.memory_space<vmem>>, vector<16x1xf32>
    tpu.vector_store %arg6[%c0_23, %c66], %61 {strides = array<i32>} : memref<16x128xf32, #tpu.memory_space<vmem>>, vector<16x1xf32>,
    %cst_24 = arith.constant 0.000000e+00 : f32
    %67 = vector.broadcast %cst_24 : f32 to vector<16x61xf32>
    %c0_25 = arith.constant 0 : index
    %c67 = arith.constant 67 : index
    %68 = vector.load %arg6[%c0_25, %c67] : memref<16x128xf32, #tpu.memory_space<vmem>>, vector<16x61xf32>
    tpu.vector_store %arg6[%c0_25, %c67], %67 {strides = array<i32>} : memref<16x128xf32, #tpu.memory_space<vmem>>, vector<16x61xf32>,
    return
  }
  func.func @transform_0(%arg0: i32) -> (i32, i32) {
    %c0_i32 = arith.constant 0 : i32
    %c0_i32_0 = arith.constant 0 : i32
    %c0_i32_1 = arith.constant 0 : i32
    return %c0_i32, %c0_i32_0 : i32, i32
  }
  func.func @transform_1(%arg0: i32) -> (i32, i32) {
    %c0_i32 = arith.constant 0 : i32
    %c0_i32_0 = arith.constant 0 : i32
    %c0_i32_1 = arith.constant 0 : i32
    return %c0_i32, %c0_i32_0 : i32, i32
  }
  func.func @transform_2(%arg0: i32) -> (i32, i32) {
    %c0_i32 = arith.constant 0 : i32
    %c0_i32_0 = arith.constant 0 : i32
    %c0_i32_1 = arith.constant 0 : i32
    return %c0_i32, %c0_i32_0 : i32, i32
  }
  func.func @transform_3(%arg0: i32) -> (i32, i32) {
    %c0_i32 = arith.constant 0 : i32
    %c0_i32_0 = arith.constant 0 : i32
    %c0_i32_1 = arith.constant 0 : i32
    return %c0_i32, %c0_i32_0 : i32, i32
  }
  func.func @transform_4(%arg0: i32) -> (i32, i32) {
    %c0_i32 = arith.constant 0 : i32
    %c0_i32_0 = arith.constant 0 : i32
    %c0_i32_1 = arith.constant 0 : i32
    return %c0_i32, %c0_i32_0 : i32, i32
  }
  func.func @transform_5(%arg0: i32) -> (i32, i32) {
    %c0_i32 = arith.constant 0 : i32
    %c0_i32_0 = arith.constant 0 : i32
    %c0_i32_1 = arith.constant 0 : i32
    return %c0_i32, %c0_i32_0 : i32, i32
  }
}

</mosaic_0001>

<llo_original>
// kernel: social_policy_act.1
$region0: #{social_policy_act.1}
  #allocation0 [shape = 'u32[]', space=smem, size = 0x4, offset = 0x4, fixed_abs, tag = 'smem constant byte address 0x4 - core index']
  #allocation1 [shape = 'u32[72,128]{1,0:T(1,128)}', space=vmem, size = 0x9000, scoped, tag = 'internal scratch']
  %s0 = inlined_call_operand.vmem [shape: f32[16,128], index: 0, kind: input, shape index: {}, may-alias: {0,5}]
  %s1 = inlined_call_operand.vmem [shape: bf16[128,64], index: 1, kind: input, shape index: {}]
  %s2 = inlined_call_operand.hbm [shape: bf16[128,256], index: 2, kind: input, shape index: {}]
  %s3 = inlined_call_operand.vmem [shape: bf16[64,6], index: 3, kind: input, shape index: {}]
  %s4 = inlined_call_operand.vmem [shape: f32[1,384], index: 4, kind: input, shape index: {}]
  %s5 = inlined_call_operand.vmem [shape: f32[16,128], index: 5, kind: output, shape index: {}, may-alias: {0,5}]
  %s6 = sld [smem:[#allocation0]]
  $region34: #{social_policy_act.1} parent=0
    _
  %s8 = ssub.s32 1, %s6
  %s9 = scalar_select 0, %s8, %s6
  $region1: #{social_policy_act.1} parent=0
    #allocation2 [shape = 'u8[65536]{0}', space=vmem, size = 0x10000, scoped, tag = 'input window, operand 2, single buffered']
    #allocation3 [shape = 's32[1]{0}', space=sflag, size = 0x4, scoped, tag = 'scoped memory for social_policy_act.1']
    %10 = vsyncpa [#allocation3], 0
    // Predicated region
    $region2: #{social_policy_act.1} parent=1 // pred_check
      _
    $region3: #{social_policy_act.1} parent=1 // pred_check_branch
      %12 = sbr.rel (0) target = $region5
    $region4: #{social_policy_act.1} parent=1 // pred_region
      _
    $region5: #{social_policy_act.1} parent=1 // pred_fallthru
      _
    // Predicated region
    $region6: #{social_policy_act.1} parent=1 // pred_check
      _
    $region7: #{social_policy_act.1} parent=1 // pred_check_branch
      %14 = sbr.rel (0) target = $region9
    $region8: #{social_policy_act.1} parent=1 // pred_region
      _
    $region9: #{social_policy_act.1} parent=1 // pred_fallthru
      _
    // Predicated region
    $region10: #{social_policy_act.1} parent=1 // pred_check
      _
    $region11: #{social_policy_act.1} parent=1 // pred_check_branch
      %16 = sbr.rel (0) target = $region13
    $region12: #{social_policy_act.1} parent=1 // pred_region
      %18 = vsyncadd [#allocation3], 0
      %s19 = sshll.u32 %s2, 4
      %s20 = int_to_ptr.hbm [resolvable:$true] %s19
      %s21 = sshll.u32 [#allocation2], 4
      %s22 = int_to_ptr.vmem [resolvable:$true] %s21
      %27 = dma.hbm_to_vmem [thread:$0]  %s20, 2048, %s22, [#allocation3], 128, 128, 8
    $region13: #{social_policy_act.1} parent=1 // pred_fallthru
      _
    // Predicated region
    $region14: #{social_policy_act.1} parent=1 // pred_check
      _
    $region15: #{social_policy_act.1} parent=1 // pred_check_branch
      %29 = sbr.rel (0) target = $region17
    $region16: #{social_policy_act.1} parent=1 // pred_region
      _
    $region17: #{social_policy_act.1} parent=1 // pred_fallthru
      _
    // Predicated region
    $region18: #{social_policy_act.1} parent=1 // pred_check
      _
    $region19: #{social_policy_act.1} parent=1 // pred_check_branch
      %31 = sbr.rel (0) target = $region21
    $region20: #{social_policy_act.1} parent=1 // pred_region
      _
    $region21: #{social_policy_act.1} parent=1 // pred_fallthru
      _
    // Predicated region
    $region22: #{social_policy_act.1} parent=1 // pred_check
      _
    $region23: #{social_policy_act.1} parent=1 // pred_check_branch
      %33 = sbr.rel (0) target = $region25
    $region24: #{social_policy_act.1} parent=1 // pred_region
      %35 = dma.done [#allocation3], 2048
    $region25: #{social_policy_act.1} parent=1 // pred_fallthru
      _
    %v37 = vld [vmem:[%s0] sm:$0xff]
    %v38 = vld [vmem:[%s0 + $0x8] sm:$0xff]
    %40 = vset.pattern.permute.xlu0 88
    %41 = vperm.xlu0 %40, %v37
    %v42 = vpop.permute.xlu0 %41
    %45 = vset.pattern.permute.xlu0 88
    %46 = vperm.xlu0 %45, %v38
    %v47 = vpop.permute.xlu0 %46
    %v49 = vmul.f32 %v37, %v42
    %v50 = vmul.f32 %v38, %v47
    %v51 = vld [vmem:[%s4] sm:$0x1]
    %v52 = vld [vmem:[%s4] sm:$0x7]
    %v53 = vld [vmem:[%s4 + $0x2] sm:$0x1]
    %v54 = vpack.c.bf16 %v38, %v37
    %v55 = vld [vmem:[%s1] sm:$0xf]
    %v56 = vld [vmem:[%s1 + $0x4] sm:$0xf]
    %v57 = vld [vmem:[%s1 + $0x8] sm:$0xf]
    %v58 = vld [vmem:[%s1 + $0xc] sm:$0xf]
    %v59 = vld [vmem:[%s1 + $0x10] sm:$0xf]
    %v60 = vld [vmem:[%s1 + $0x14] sm:$0xf]
    %v61 = vld [vmem:[%s1 + $0x18] sm:$0xf]
    %v62 = vld [vmem:[%s1 + $0x1c] sm:$0xf]
    %v63 = vld [vmem:[%s1 + $0x20] sm:$0xf]
    %v64 = vld [vmem:[%s1 + $0x24] sm:$0xf]
    %v65 = vld [vmem:[%s1 + $0x28] sm:$0xf]
    %v66 = vld [vmem:[%s1 + $0x2c] sm:$0xf]
    %v67 = vld [vmem:[%s1 + $0x30] sm:$0xf]
    %v68 = vld [vmem:[%s1 + $0x34] sm:$0xf]
    %v69 = vld [vmem:[%s1 + $0x38] sm:$0xf]
    %v70 = vld [vmem:[%s1 + $0x3c] sm:$0xf]
    %v72 = vperm.slane %v51, 0
    %v90 = vunpack.c.l.b16 %v55
    %v91 = vunpack.c.l.b16 %v56
    %v92 = vunpack.c.l.b16 %v57
    %v93 = vunpack.c.l.b16 %v58
    %v94 = vunpack.c.l.b16 %v59
    %v95 = vunpack.c.l.b16 %v60
    %v96 = vunpack.c.l.b16 %v61
    %v97 = vunpack.c.l.b16 %v62
    %v98 = vunpack.c.l.b16 %v63
    %v99 = vunpack.c.l.b16 %v64
    %v100 = vunpack.c.l.b16 %v65
    %v101 = vunpack.c.l.b16 %v66
    %v102 = vunpack.c.l.b16 %v67
    %v103 = vunpack.c.l.b16 %v68
    %v104 = vunpack.c.l.b16 %v69
    %v105 = vunpack.c.l.b16 %v70
    %v106 = vpack.c.b16 %v91, %v90
    %v107 = vpack.c.b16 %v93, %v92
    %v108 = vpack.c.b16 %v95, %v94
    %v109 = vpack.c.b16 %v97, %v96
    %v110 = vpack.c.b16 %v99, %v98
    %v111 = vpack.c.b16 %v101, %v100
    %v112 = vpack.c.b16 %v103, %v102
    %v113 = vpack.c.b16 %v105, %v104
    %122 = vmatpush.bf16.msra.mxu0 %v113
    %123 = vmatpush.bf16.msra.mxu0 %v112
    %124 = vmatpush.bf16.msra.mxu0 %v111
    %125 = vmatpush.bf16.msra.mxu0 %v110
    %126 = vmatpush.bf16.msra.mxu0 %v109
    %127 = vmatpush.bf16.msra.mxu0 %v108
    %128 = vmatpush.bf16.msra.mxu0 %v107
    %129 = vmatpush.bf16.msra.mxu0 %v106
    %130 = vmatmul.bf16.gmra.mxu0 %v54
    %v131 = vpop.f32.mrf.mxu0
    %v132 = vadd.f32 %v72, %v131
    %v133 = vpop.f32.mrf.mxu0
    %v134 = vadd.f32 %v72, %v133
    %135 = vdwg.mxu0
    %v136 = vtanh.pop %v132
    %v137 = vtanh.pop %v134
    %140 = vrot.lane.b32.xlu0 %v49, 64
    %v141 = vpop.permute.xlu0 %140
    %142 = vrot.lane.b32.xlu0 %v50, 64
    %v143 = vpop.permute.xlu0 %142
    %vm146 = vcmask 523264
    %v147 = vsel %vm146, %v136, %v141
    %v148 = vsel %vm146, %v137, %v143
    %v149 = vpack.c.bf16 %v148, %v147
    %v150 = vld [vmem:[#allocation2] sm:$0xff]
    %v151 = vld [vmem:[#allocation2 + $0x8] sm:$0xff]
    %v152 = vld [vmem:[#allocation2 + $0x10] sm:$0xff]
    %v153 = vld [vmem:[#allocation2 + $0x18] sm:$0xff]
    %v154 = vld [vmem:[#allocation2 + $0x20] sm:$0xff]
    %v155 = vld [vmem:[#allocation2 + $0x28] sm:$0xff]
    %v156 = vld [vmem:[#allocation2 + $0x30] sm:$0xff]
    %v157 = vld [vmem:[#allocation2 + $0x38] sm:$0xff]
    %v158 = vld [vmem:[#allocation2 + $0x40] sm:$0xff]
    %v159 = vld [vmem:[#allocation2 + $0x48] sm:$0xff]
    %v160 = vld [vmem:[#allocation2 + $0x50] sm:$0xff]
    %v161 = vld [vmem:[#allocation2 + $0x58] sm:$0xff]
    %v162 = vld [vmem:[#allocation2 + $0x60] sm:$0xff]
    %v163 = vld [vmem:[#allocation2 + $0x68] sm:$0xff]
    %v164 = vld [vmem:[#allocation2 + $0x70] sm:$0xff]
    %v165 = vld [vmem:[#allocation2 + $0x78] sm:$0xff]
    %v167 = vperm.slane %v52, 0
    %v168 = vperm.slane %v52, 1
    %v169 = vperm.slane %v52, 2
    %v186 = vunpack.c.l.b16 %v150
    %v187 = vunpack.c.h.b16 %v150
    %v188 = vunpack.c.l.b16 %v151
    %v189 = vunpack.c.h.b16 %v151
    %v190 = vunpack.c.l.b16 %v152
    %v191 = vunpack.c.h.b16 %v152
    %v192 = vunpack.c.l.b16 %v153
    %v193 = vunpack.c.h.b16 %v153
    %v194 = vunpack.c.l.b16 %v154
    %v195 = vunpack.c.h.b16 %v154
    %v196 = vunpack.c.l.b16 %v155
    %v197 = vunpack.c.h.b16 %v155
    %v198 = vunpack.c.l.b16 %v156
    %v199 = vunpack.c.h.b16 %v156
    %v200 = vunpack.c.l.b16 %v157
    %v201 = vunpack.c.h.b16 %v157
    %v202 = vunpack.c.l.b16 %v158
    %v203 = vunpack.c.h.b16 %v158
    %v204 = vunpack.c.l.b16 %v159
    %v205 = vunpack.c.h.b16 %v159
    %v206 = vunpack.c.l.b16 %v160
    %v207 = vunpack.c.h.b16 %v160
    %v208 = vunpack.c.l.b16 %v161
    %v209 = vunpack.c.h.b16 %v161
    %v210 = vunpack.c.l.b16 %v162
    %v211 = vunpack.c.h.b16 %v162
    %v212 = vunpack.c.l.b16 %v163
    %v213 = vunpack.c.h.b16 %v163
    %v214 = vunpack.c.l.b16 %v164
    %v215 = vunpack.c.h.b16 %v164
    %v216 = vunpack.c.l.b16 %v165
    %v217 = vunpack.c.h.b16 %v165
    %v218 = vpack.c.b16 %v188, %v186
    %v219 = vpack.c.b16 %v189, %v187
    %v220 = vpack.c.b16 %v192, %v190
    %v221 = vpack.c.b16 %v193, %v191
    %v222 = vpack.c.b16 %v196, %v194
    %v223 = vpack.c.b16 %v197, %v195
    %v224 = vpack.c.b16 %v200, %v198
    %v225 = vpack.c.b16 %v201, %v199
    %v226 = vpack.c.b16 %v204, %v202
    %v227 = vpack.c.b16 %v205, %v203
    %v228 = vpack.c.b16 %v208, %v206
    %v229 = vpack.c.b16 %v209, %v207
    %v230 = vpack.c.b16 %v212, %v210
    %v231 = vpack.c.b16 %v213, %v211
    %v232 = vpack.c.b16 %v216, %v214
    %v233 = vpack.c.b16 %v217, %v215
    %250 = vrot.lane.b32.xlu0 %v167, 64
    %v251 = vpop.permute.xlu0 %250
    %252 = vrot.lane.b32.xlu0 %v168, 64
    %v253 = vpop.permute.xlu0 %252
    %254 = vrot.lane.b32.xlu0 %v169, 64
    %v255 = vpop.permute.xlu0 %254
    %v256 = vsel %vm146, %v251, %v253
    %v257 = vsel %vm146, %v253, %v255
    %260 = vmatpush.bf16.msra.mxu0 %v232
    %261 = vmatpush.bf16.msra.mxu0 %v230
    %262 = vmatpush.bf16.msra.mxu0 %v228
    %263 = vmatpush.bf16.msra.mxu0 %v226
    %264 = vmatpush.bf16.msra.mxu0 %v224
    %265 = vmatpush.bf16.msra.mxu0 %v222
    %266 = vmatpush.bf16.msra.mxu0 %v220
    %267 = vmatpush.bf16.msra.mxu0 %v218
    %268 = vmatmul.bf16.gmra.mxu0 %v149
    %v269 = vpop.f32.mrf.mxu0
    %v270 = vadd.f32 %v256, %v269
    %v271 = vpop.f32.mrf.mxu0
    %v272 = vadd.f32 %v256, %v271
    %273 = vdwg.mxu0
    %274 = vmatpush.bf16.msra.mxu0 %v233
    %275 = vmatpush.bf16.msra.mxu0 %v231
    %276 = vmatpush.bf16.msra.mxu0 %v229
    %277 = vmatpush.bf16.msra.mxu0 %v227
    %278 = vmatpush.bf16.msra.mxu0 %v225
    %279 = vmatpush.bf16.msra.mxu0 %v223
    %280 = vmatpush.bf16.msra.mxu0 %v221
    %281 = vmatpush.bf16.msra.mxu0 %v219
    %282 = vmatmul.bf16.gmra.mxu0 %v149
    %v283 = vpop.f32.mrf.mxu0
    %v284 = vadd.f32 %v257, %v283
    %v285 = vpop.f32.mrf.mxu0
    %v286 = vadd.f32 %v257, %v285
    %287 = vdwg.mxu0
    %v288 = vxor.u32 %v270, 2147483648
    %v289 = vxor.u32 %v272, 2147483648
    %v290 = vmul.f32 %v288, 1.442695
    %v291 = vpow.pop %v290
    %v292 = vmul.f32 %v289, 1.442695
    %v293 = vpow.pop %v292
    %v294 = vadd.f32 %v291, 1.0
    %v295 = vadd.f32 %v293, 1.0
    %v296 = vrcp.pop %v294
    %v297 = vmul.f32 %v294, %v296
    %v298 = vsub.f32 1.0, %v297
    %v299 = vmul.f32 %v296, %v298
    %v300 = vadd.f32 %v296, %v299
    %vm301 = vweird.f32 %v294
    %vm302 = vweird.f32 %v296
    %vm303 = vmor %vm301, %vm302
    %v304 = vsel %vm303, %v296, %v300
    %v305 = vand.u32 2147483647, %v294
    %vm306 = vcmp.eq.f32.partialorder %v305, 8.507059e+37
    %v307 = vand.u32 %v294, 2147483648
    %v308 = vor.u32 1.1754944e-38, %v307
    %v309 = vsel %vm306, %v308, %v304
    %v310 = vmul.f32 1.0, %v309
    %v311 = vrcp.pop %v295
    %v312 = vmul.f32 %v295, %v311
    %v313 = vsub.f32 1.0, %v312
    %v314 = vmul.f32 %v311, %v313
    %v315 = vadd.f32 %v311, %v314
    %vm316 = vweird.f32 %v295
    %vm317 = vweird.f32 %v311
    %vm318 = vmor %vm316, %vm317
    %v319 = vsel %vm318, %v311, %v315
    %v320 = vand.u32 2147483647, %v295
    %vm321 = vcmp.eq.f32.partialorder %v320, 8.507059e+37
    %v322 = vand.u32 %v295, 2147483648
    %v323 = vor.u32 1.1754944e-38, %v322
    %v324 = vsel %vm321, %v323, %v319
    %v325 = vmul.f32 1.0, %v324
    %328 = vrot.lane.b32.xlu0 %v284, 64
    %v329 = vpop.permute.xlu0 %328
    %330 = vrot.lane.b32.xlu0 %v286, 64
    %v331 = vpop.permute.xlu0 %330
    %v334 = vmul.f32 %v310, %v329
    %v335 = vmul.f32 %v325, %v331
    %v336 = vadd.f32 %v284, %v334
    %v337 = vadd.f32 %v286, %v335
    %v338 = vtanh.pop %v336
    %v339 = vtanh.pop %v337
    %v340 = vsub.f32 1.0, %v310
    %v341 = vsub.f32 1.0, %v325
    %344 = vrot.lane.b32.xlu0 %v338, 64
    %v345 = vpop.permute.xlu0 %344
    %346 = vrot.lane.b32.xlu0 %v339, 64
    %v347 = vpop.permute.xlu0 %346
    %v350 = vmul.f32 %v340, %v345
    %v351 = vmul.f32 %v341, %v347
    %v352 = vmul.f32 %v310, %v141
    %v353 = vmul.f32 %v325, %v143
    %v354 = vadd.f32 %v350, %v352
    %v355 = vadd.f32 %v351, %v353
    %v356 = vpack.c.bf16 %v355, %v354
    %v357 = vld [vmem:[%s3] sm:$0xf]
    %v358 = vld [vmem:[%s3 + $0x4] sm:$0xf]
    %v359 = vld [vmem:[%s3 + $0x8] sm:$0xf]
    %v360 = vld [vmem:[%s3 + $0xc] sm:$0xf]
    %v361 = vld [vmem:[%s3 + $0x10] sm:$0xf]
    %v362 = vld [vmem:[%s3 + $0x14] sm:$0xf]
    %v363 = vld [vmem:[%s3 + $0x18] sm:$0xf]
    %v364 = vld [vmem:[%s3 + $0x1c] sm:$0xf]
    %v366 = vperm.slane %v53, 0
    %368 = vrot.lane.b32.xlu0 %v356, 64
    %v369 = vpop.permute.xlu0 %368
    %v378 = vunpack.c.l.b16 %v357
    %v379 = vunpack.c.l.b16 %v358
    %v380 = vunpack.c.l.b16 %v359
    %v381 = vunpack.c.l.b16 %v360
    %v382 = vunpack.c.l.b16 %v361
    %v383 = vunpack.c.l.b16 %v362
    %v384 = vunpack.c.l.b16 %v363
    %v385 = vunpack.c.l.b16 %v364
    %v386 = vpack.c.b16 %v379, %v378
    %v387 = vpack.c.b16 %v381, %v380
    %v388 = vpack.c.b16 %v383, %v382
    %v389 = vpack.c.b16 %v385, %v384
    %394 = vrot.lane.b32.xlu0 %v366, 64
    %v395 = vpop.permute.xlu0 %394
    %v398 = vsel %vm146, %v369, 0
    %400 = vmatpush.bf16.msra.mxu0 0
    %401 = vmatpush.bf16.msra.mxu0 0
    %402 = vmatpush.bf16.msra.mxu0 0
    %403 = vmatpush.bf16.msra.mxu0 0
    %404 = vmatpush.bf16.msra.mxu0 %v389
    %405 = vmatpush.bf16.msra.mxu0 %v388
    %406 = vmatpush.bf16.msra.mxu0 %v387
    %407 = vmatpush.bf16.msra.mxu0 %v386
    %408 = vmatmul.bf16.gmra.mxu0 %v398
    %v409 = vpop.f32.mrf.mxu0
    %v410 = vadd.f32 %v395, %v409
    %v411 = vpop.f32.mrf.mxu0
    %v412 = vadd.f32 %v395, %v411
    %413 = vdwg.mxu0
    %vm414 = vcmask 39936
    %v415 = vsel %vm414, %v410, -inf
    %416 = vmax.xlane.f32.xlu0 %v415
    %v417 = vpop.xlane.xlu0 %416
    %v418 = vsel %vm414, %v412, -inf
    %419 = vmax.xlane.f32.xlu0 %v418
    %v420 = vpop.xlane.xlu0 %419
    %v421 = vsub.f32 %v410, %v417
    %v422 = vsub.f32 %v412, %v420
    %v423 = vmul.f32 %v421, 1.442695
    %v424 = vpow.pop %v423
    %v425 = vmul.f32 %v422, 1.442695
    %v426 = vpow.pop %v425
    %v427 = vsel %vm414, %v424, 0.0
    %428 = vadd.xlane.f32.xlu0 %v427
    %v429 = vpop.xlane.xlu0 %428
    %v430 = vsel %vm414, %v426, 0.0
    %431 = vadd.xlane.f32.xlu0 %v430
    %v432 = vpop.xlane.xlu0 %431
    %v433 = vlog2.pop %v429
    %v434 = vmul.f32 %v433, 0.6931472
    %v435 = vlog2.pop %v432
    %v436 = vmul.f32 %v435, 0.6931472
    %v437 = vadd.f32 %v417, %v434
    %v438 = vadd.f32 %v420, %v436
    %v439 = vlaneseq
    %v440 = vand.u32 %v439, 127
    %vm441 = vcmp.eq.f32.partialorder %v410, %v417
    %vm442 = vcmp.eq.f32.partialorder %v412, %v420
    %v443 = vsel %vm441, %v440, 5
    %v444 = vsel %vm442, %v440, 5
    %v445 = vsel %vm414, %v443, 2147483647
    %v446 = vand.u32 %v445, 65535
    %v447 = vshra.s32 %v445, 16
    %v448 = vcvt.s32.f32 %v446
    %v449 = vcvt.s32.f32 %v447
    %450 = vmin.xlane.f32.xlu0 %v449
    %v451 = vpop.xlane.xlu0 %450
    %vm452 = vcmp.eq.f32.partialorder %v449, %v451
    %v453 = vsel %vm452, %v448, inf
    %454 = vmin.xlane.f32.xlu0 %v453
    %v455 = vpop.xlane.xlu0 %454
    %v456 = vcvt.f32.s32 %v455
    %v457 = vcvt.f32.s32 %v451
    %v458 = vshll.u32 %v457, 16
    %v459 = vadd.s32 %v458, %v456
    %v460 = vsel %vm414, %v444, 2147483647
    %v461 = vand.u32 %v460, 65535
    %v462 = vshra.s32 %v460, 16
    %v463 = vcvt.s32.f32 %v461
    %v464 = vcvt.s32.f32 %v462
    %465 = vmin.xlane.f32.xlu0 %v464
    %v466 = vpop.xlane.xlu0 %465
    %vm467 = vcmp.eq.f32.partialorder %v464, %v466
    %v468 = vsel %vm467, %v463, inf
    %469 = vmin.xlane.f32.xlu0 %v468
    %v470 = vpop.xlane.xlu0 %469
    %v471 = vcvt.f32.s32 %v470
    %v472 = vcvt.f32.s32 %v466
    %v473 = vshll.u32 %v472, 16
    %v474 = vadd.s32 %v473, %v471
    %v475 = vsub.f32 %v417, %v437
    %v476 = vsub.f32 %v420, %v438
    %479 = vrot.lane.b32.xlu0 %v354, 64
    %v480 = vpop.permute.xlu0 %479
    %481 = vrot.lane.b32.xlu0 %v355, 64
    %v482 = vpop.permute.xlu0 %481
    %485 = vst.msk [vmem:[%s5] sm:$0xff] %vm146, %v480
    %486 = vst.msk [vmem:[%s5 + $0x8] sm:$0xff] %vm146, %v482
    %489 = vrot.lane.b32.xlu0 %v410, 59
    %v490 = vpop.permute.xlu0 %489
    %491 = vrot.lane.b32.xlu0 %v412, 59
    %v492 = vpop.permute.xlu0 %491
    %vm495 = vcmask 531968
    %496 = vst.msk [vmem:[%s5] sm:$0xff] %vm495, %v490
    %497 = vst.msk [vmem:[%s5 + $0x8] sm:$0xff] %vm495, %v492
    %v498 = vcvt.s32.f32 %v459
    %v499 = vcvt.s32.f32 %v474
    %vm500 = vcmask 540168
    %501 = vst.msk [vmem:[%s5] sm:$0xff] %vm500, %v498
    %502 = vst.msk [vmem:[%s5 + $0x8] sm:$0xff] %vm500, %v499
    %vm503 = vcmask 548368
    %504 = vst.msk [vmem:[%s5] sm:$0xff] %vm503, %v475
    %505 = vst.msk [vmem:[%s5 + $0x8] sm:$0xff] %vm503, %v476
    %vm506 = vcmask 1048088
    %507 = vst.msk [vmem:[%s5] sm:$0xff] %vm506, 0.0
    %508 = vst.msk [vmem:[%s5 + $0x8] sm:$0xff] %vm506, 0.0
    // Predicated region
    $region26: #{social_policy_act.1} parent=1 // pred_check
      _
    $region27: #{social_policy_act.1} parent=1 // pred_check_branch
      %510 = sbr.rel (0) target = $region29
    $region28: #{social_policy_act.1} parent=1 // pred_region
      _
    $region29: #{social_policy_act.1} parent=1 // pred_fallthru
      _
    // Predicated region
    $region30: #{social_policy_act.1} parent=1 // pred_check
      _
    $region31: #{social_policy_act.1} parent=1 // pred_check_branch
      %512 = sbr.rel (0) target = $region33
    $region32: #{social_policy_act.1} parent=1 // pred_region
      _
    $region33: #{social_policy_act.1} parent=1 // pred_fallthru
      _
    %513 = vsyncpa [#allocation3], 1

</llo_original>
